<compile_context>
chip_gen: v5e
topology: v5e:2x2
jax: 0.10.0
libtpu: 0.0.40
codegen_flags: <defaults>
</compile_context>

<pallas_src>
import jax
import jax.numpy as jnp
from jax.experimental import pallas as pl
from jax.experimental.pallas import tpu as pltpu

# ----- config (mirrors the module __init__ derived shapes) -----
SRC_LAYERS  = 4                       # src_config.num_hidden_layers
TGT_LAYERS  = 2                       # tgt_config.num_hidden_layers
SRC_HEADS   = 4                       # src_config.num_key_value_heads
TGT_HEADS   = 2                       # tgt_config.num_key_value_heads
HEADS_RATIO = SRC_HEADS // TGT_HEADS  # 2
SRC_DIM     = 32                      # hidden_size // src_heads (hidden=128)
TGT_DIM     = 64
CF          = 2                       # compression_factor
FEAT        = SRC_DIM * CF * HEADS_RATIO   # 128 = compressor in_features
HID2        = 2 * SRC_DIM                  # 64  = packed K|V hidden width
OUT_PACK    = 2 * TGT_DIM                  # 128 = packed K|V output width


def _round_up(x, m):
    return (x + m - 1) // m * m


def _pick_tile_r(n_rows):
    """Row tile: generation-aware max; >=2 grid steps when possible (v7x has
    2 TensorCores); multiple of 16 so bf16 (16,128) tiling is satisfied."""
    tile_max = 2048                                   # safe on v7x (64 MiB VMEM)
    try:
        vmem = int(getattr(pltpu.get_tpu_info(), "vmem_capacity_bytes", 0) or 0)
        if vmem >= 96 * 1024 * 1024:                  # v5e / v6e: 128 MiB VMEM
            tile_max = 4096
    except Exception:
        pass
    if n_rows < 16:
        return n_rows                                 # block == full dim (allowed)
    return min(tile_max, _round_up(-(-n_rows // 2), 16))


# -------------------- Pallas kernel --------------------
def _kv_compress_kernel(p_ref, k_ref, v_ref, w1p_ref, b1p_ref, w2p_ref, b2p_ref,
                        out_ref):
    # p_ref   : SMEM [T, L] f32 layer-mix probs (scalar prefetch)
    # k_ref   : VMEM [L, TILE_R, FEAT]           (f32 or bf16, streaming dtype)
    # v_ref   : VMEM [L, TILE_R, FEAT]
    # w1p_ref : VMEM [T, 2, FEAT, HID2]          w1p[t,0]=[W1|0], w1p[t,1]=[0|W1]
    # b1p_ref : VMEM [T, 1, HID2]      f32       [b1|b1]
    # w2p_ref : VMEM [T, HID2, OUT_PACK]         block-diag(W2, W2)
    # b2p_ref : VMEM [T, 1, OUT_PACK]  f32       [b2|b2]
    # out_ref : VMEM [T, TILE_R, OUT_PACK]       K in lanes :64, V in 64:
    cdt = w1p_ref.dtype
    xk = [None] * TGT_LAYERS
    xv = [None] * TGT_LAYERS
    # layer mix (f32 accumulation): each k/v tile is loaded from VMEM once and
    # feeds BOTH target-layer accumulators.
    for l in range(SRC_LAYERS):
        kl = k_ref[l].astype(jnp.float32)
        vl = v_ref[l].astype(jnp.float32)
        for t in range(TGT_LAYERS):
            p = p_ref[t, l]
            if l == 0:
                xk[t] = p * kl
                xv[t] = p * vl
            else:
                xk[t] = xk[t] + p * kl
                xv[t] = xv[t] + p * vl
    # per target layer: fused compressor with K|V packed along the lane axis
    for t in range(TGT_LAYERS):
        ak = xk[t].astype(cdt)
        av = xv[t].astype(cdt)
        # packed hidden [h_K | h_V]: zero-padded W1 halves -> no concatenate
        h = (jnp.dot(ak, w1p_ref[t, 0], preferred_element_type=jnp.float32)
             + jnp.dot(av, w1p_ref[t, 1], preferred_element_type=jnp.float32)
             + b1p_ref[t])
        h = jnp.maximum(h, 0.0).astype(cdt)
        # block-diag W2 emits the lane-dense 128-wide packed [K|V] output directly
        o = jnp.dot(h, w2p_ref[t], preferred_element_type=jnp.float32) + b2p_ref[t]
        out_ref[t] = o.astype(out_ref.dtype)


# -------------------- glue: layer_map_net (tiny MLP) --------------------
def layer_probs(params):
    # tgt_layer_idx / tgt_layers -> Linear(1,64) -> ReLU -> Linear(64,64) -> ReLU
    # -> Linear(64, src_layers) -> softmax
    t = (jnp.arange(TGT_LAYERS, dtype=jnp.float32) / TGT_LAYERS)[:, None]   # [T, 1]
    h = jax.nn.relu(t @ params["lm_w1"] + params["lm_b1"])
    h = jax.nn.relu(h @ params["lm_w2"] + params["lm_b2"])
    logits = h @ params["lm_w3"] + params["lm_b3"]                          # [T, L]
    return jax.nn.softmax(logits, axis=-1)                                  # [T, L]


# -------------------- wrapper --------------------
def cross_model_kv_compress(k_src, v_src, params):
    """k_src, v_src: [SRC_LAYERS, B, SRC_HEADS, S, SRC_DIM], f32 or bf16.

    Streaming dtype (HBM traffic) follows the input dtype: pass a bf16 KV cache
    to halve bandwidth.  Output dtype matches the input dtype.
    """
    L, B, Hs, S, Ds = k_src.shape
    assert L == SRC_LAYERS and Hs == SRC_HEADS and Ds == SRC_DIM
    # TODO(synk): the torch remainder>0 branch feeds a mismatched feature size into
    # the compressor Linear (shape error in torch too); only S % CF == 0 supported.
    assert S % CF == 0
    CL = S // CF
    R = B * TGT_HEADS * CL                             # total compressed rows

    # torch's row-major reshape, collapsed to rows; pure metadata, no HBM pass.
    k_r = k_src.reshape(L, R, FEAT)
    v_r = v_src.reshape(L, R, FEAT)

    cdt = k_src.dtype                                  # streaming / matmul dtype
    out_dtype = k_src.dtype

    # ---- tiny per-call weight prep (zero-padded / block-diagonal packing) ----
    # h = [h_K | h_V] = relu(xk @ [W1|0] + xv @ [0|W1] + [b1|b1])
    # o = [o_K | o_V] = h @ blockdiag(W2, W2) + [b2|b2]
    w1 = params["w1"].astype(cdt)                      # [T, FEAT, SRC_DIM]
    z1 = jnp.zeros_like(w1)
    w1p = jnp.stack([jnp.concatenate([w1, z1], axis=-1),
                     jnp.concatenate([z1, w1], axis=-1)], axis=1)       # [T,2,FEAT,HID2]
    w2 = params["w2"].astype(cdt)                      # [T, SRC_DIM, TGT_DIM]
    z2 = jnp.zeros_like(w2)
    w2p = jnp.concatenate([jnp.concatenate([w2, z2], axis=-1),
                           jnp.concatenate([z2, w2], axis=-1)], axis=1)  # [T,HID2,OUT_PACK]
    b1 = params["b1"].astype(jnp.float32)
    b1p = jnp.concatenate([b1, b1], axis=-1)[:, None, :]                 # [T,1,HID2]
    b2 = params["b2"].astype(jnp.float32)
    b2p = jnp.concatenate([b2, b2], axis=-1)[:, None, :]                 # [T,1,OUT_PACK]

    probs = layer_probs(params)                        # [T, L] f32 -> SMEM prefetch

    tile_r = _pick_tile_r(R)
    grid = (-(-R // tile_r),)                          # no pad: partial last block OK
    vmem_limit = (96 if tile_r > 2048 else 48) * 1024 * 1024

    kv_spec = pl.BlockSpec((SRC_LAYERS, tile_r, FEAT), lambda r, p: (0, r, 0))
    out_spec = pl.BlockSpec((TGT_LAYERS, tile_r, OUT_PACK), lambda r, p: (0, r, 0))
    # weight/bias block indices constant along the row axis -> DMA'd once
    w1p_spec = pl.BlockSpec((TGT_LAYERS, 2, FEAT, HID2), lambda r, p: (0, 0, 0, 0))
    const3 = lambda shape: pl.BlockSpec(shape, lambda r, p: (0, 0, 0))

    isz = jnp.dtype(cdt).itemsize
    bytes_accessed = int(2 * L * R * FEAT * isz                    # k + v reads
                         + TGT_LAYERS * R * OUT_PACK * isz         # packed output write
                         + (w1p.size + w2p.size) * isz + (b1p.size + b2p.size) * 4)
    flops = int(4 * TGT_LAYERS * L * R * FEAT                      # layer-mix FMAs
                + TGT_LAYERS * (2 * 2 * R * FEAT * HID2            # padded first Linear
                                + 2 * R * HID2 * OUT_PACK))        # block-diag second Linear

    out = pl.pallas_call(
        _kv_compress_kernel,
        out_shape=jax.ShapeDtypeStruct((TGT_LAYERS, R, OUT_PACK), out_dtype),
        grid_spec=pltpu.PrefetchScalarGridSpec(
            num_scalar_prefetch=1,                     # probs -> SMEM
            grid=grid,
            in_specs=[kv_spec, kv_spec,
                      w1p_spec,
                      const3((TGT_LAYERS, 1, HID2)),
                      const3((TGT_LAYERS, HID2, OUT_PACK)),
                      const3((TGT_LAYERS, 1, OUT_PACK))],
            out_specs=out_spec),
        compiler_params=pltpu.CompilerParams(
            dimension_semantics=("parallel",),
            vmem_limit_bytes=vmem_limit),
        cost_estimate=pl.CostEstimate(flops=flops, transcendentals=0,
                                      bytes_accessed=bytes_accessed),
    )(probs, k_r, v_r, w1p, b1p, w2p, b2p)

    # unpack K|V lanes, restore the module's output layout (no row slice needed:
    # the output array is exactly R rows; partial-block OOB rows were never stored)
    ko = out[..., :TGT_DIM].reshape(TGT_LAYERS, B, TGT_HEADS, CL, TGT_DIM)
    vo = out[..., TGT_DIM:].reshape(TGT_LAYERS, B, TGT_HEADS, CL, TGT_DIM)
    return [(ko[t], vo[t]) for t in range(TGT_LAYERS)]


# -------------------- pure-JAX reference (for verification) --------------------
def reference(k_src, v_src, params):
    probs = layer_probs(params)
    k = k_src.astype(jnp.float32)
    v = v_src.astype(jnp.float32)
    L, B, Hs, S, Ds = k.shape
    CL = S // CF
    out = []
    for t in range(TGT_LAYERS):
        kc = jnp.einsum("l,lbhsd->bhsd", probs[t], k).reshape(B, TGT_HEADS, CL, FEAT)
        vc = jnp.einsum("l,lbhsd->bhsd", probs[t], v).reshape(B, TGT_HEADS, CL, FEAT)
        comp = lambda x: jax.nn.relu(x @ params["w1"][t] + params["b1"][t]) @ params["w2"][t] + params["b2"][t]
        out.append((comp(kc), comp(vc)))
    return out


# -------------------- deterministic parameter init --------------------
def init_params(key):
    ks = jax.random.split(key, 10)
    u = lambda k, shape, fan_in: jax.random.uniform(
        k, shape, jnp.float32, -1.0 / jnp.sqrt(fan_in), 1.0 / jnp.sqrt(fan_in))
    return {
        # layer_map_net: Linear(1,64) -> ReLU -> Linear(64,64) -> ReLU -> Linear(64, src_layers)
        "lm_w1": u(ks[0], (1, 64), 1.0),   "lm_b1": u(ks[1], (64,), 1.0),
        "lm_w2": u(ks[2], (64, 64), 64.0), "lm_b2": u(ks[3], (64,), 64.0),
        "lm_w3": u(ks[4], (64, SRC_LAYERS), 64.0), "lm_b3": u(ks[5], (SRC_LAYERS,), 64.0),
        # per-target-layer compressors: Linear(FEAT, src_dim) -> ReLU -> Linear(src_dim, 64)
        "w1": u(ks[6], (TGT_LAYERS, FEAT, SRC_DIM), float(FEAT)),
        "b1": u(ks[7], (TGT_LAYERS, SRC_DIM), float(FEAT)),
        "w2": u(ks[8], (TGT_LAYERS, SRC_DIM, TGT_DIM), float(SRC_DIM)),
        "b2": u(ks[9], (TGT_LAYERS, TGT_DIM), float(SRC_DIM)),
    }


if __name__ == "__main__":
    key = jax.random.PRNGKey(0)
    kp, kk, kv = jax.random.split(key, 3)
    params = init_params(kp)

    B, S = 2, 8
    k_src = jax.random.normal(kk, (SRC_LAYERS, B, SRC_HEADS, S, SRC_DIM), jnp.float32)
    v_src = jax.random.normal(kv, (SRC_LAYERS, B, SRC_HEADS, S, SRC_DIM), jnp.float32)

    # --- f32 path (matches the torch module's dtype semantics, strict check) ---
    out = cross_model_kv_compress(k_src, v_src, params)
    jax.block_until_ready(out)
    ref = reference(k_src, v_src, params)
    for (ko, vo), (kr, vr) in zip(out, ref):
        assert ko.shape == (B, TGT_HEADS, S // CF, TGT_DIM)
        assert jnp.allclose(ko, kr, atol=1e-4, rtol=1e-4)
        assert jnp.allclose(vo, vr, atol=1e-4, rtol=1e-4)

    # --- bf16 streaming path (KV cache already bf16 upstream): half HBM traffic ---
    k_bf = k_src.astype(jnp.bfloat16)
    v_bf = v_src.astype(jnp.bfloat16)
    out_bf = cross_model_kv_compress(k_bf, v_bf, params)
    jax.block_until_ready(out_bf)
    ref_bf = reference(k_bf, v_bf, params)
    for (ko, vo), (kr, vr) in zip(out_bf, ref_bf):
        assert ko.dtype == jnp.bfloat16 and vo.dtype == jnp.bfloat16
        assert jnp.allclose(ko.astype(jnp.float32), kr, atol=5e-2, rtol=5e-2)
        assert jnp.allclose(vo.astype(jnp.float32), vr, atol=5e-2, rtol=5e-2)

    print("KERNEL_OK")
</pallas_src>

<mosaic_0001>
module attributes {stable_mosaic.version = 11 : i64} {
  func.func @_kv_compress_kernel(%arg0: i32, %arg1: memref<2x4xf32, #tpu.memory_space<smem>>, %arg2: memref<4x16x128xf32, #tpu.memory_space<vmem>>, %arg3: memref<4x16x128xf32, #tpu.memory_space<vmem>>, %arg4: memref<2x2x128x64xf32, #tpu.memory_space<vmem>>, %arg5: memref<2x1x64xf32, #tpu.memory_space<vmem>>, %arg6: memref<2x64x128xf32, #tpu.memory_space<vmem>>, %arg7: memref<2x1x128xf32, #tpu.memory_space<vmem>>, %arg8: memref<2x16x128xf32, #tpu.memory_space<vmem>>) attributes {dimension_semantics = [#tpu.dimension_semantics<parallel>], iteration_bounds = array<i64: 1>, scalar_prefetch = 1 : i64, scratch_operands = 0 : i64, tpu.core_type = #tpu.core_type<tc>, window_params = [{transform_indices = @transform_0, window_bounds = array<i64: 4, 16, 128>}, {transform_indices = @transform_1, window_bounds = array<i64: 4, 16, 128>}, {pipeline_mode = #tpu.pipeline_mode<synchronous>, transform_indices = @transform_2, window_bounds = array<i64: 2, 2, 128, 64>}, {pipeline_mode = #tpu.pipeline_mode<synchronous>, transform_indices = @transform_3, window_bounds = array<i64: 2, 1, 64>}, {pipeline_mode = #tpu.pipeline_mode<synchronous>, transform_indices = @transform_4, window_bounds = array<i64: 2, 64, 128>}, {pipeline_mode = #tpu.pipeline_mode<synchronous>, transform_indices = @transform_5, window_bounds = array<i64: 2, 1, 128>}, {transform_indices = @transform_6, window_bounds = array<i64: 2, 16, 128>}]} {
    %c0 = arith.constant 0 : index
    %c0_0 = arith.constant 0 : index
    %c0_1 = arith.constant 0 : index
    %0 = vector.load %arg2[%c0, %c0_0, %c0_1] : memref<4x16x128xf32, #tpu.memory_space<vmem>>, vector<1x16x128xf32>
    %1 = vector.shape_cast %0 : vector<1x16x128xf32> to vector<16x128xf32>
    %c0_2 = arith.constant 0 : index
    %c0_3 = arith.constant 0 : index
    %c0_4 = arith.constant 0 : index
    %2 = vector.load %arg3[%c0_2, %c0_3, %c0_4] : memref<4x16x128xf32, #tpu.memory_space<vmem>>, vector<1x16x128xf32>
    %3 = vector.shape_cast %2 : vector<1x16x128xf32> to vector<16x128xf32>
    %c0_5 = arith.constant 0 : index
    %c0_6 = arith.constant 0 : index
    %4 = memref.load %arg1[%c0_5, %c0_6] : memref<2x4xf32, #tpu.memory_space<smem>>
    %5 = vector.broadcast %4 : f32 to vector<16x128xf32>
    %6 = arith.mulf %5, %1 : vector<16x128xf32>
    %7 = vector.broadcast %4 : f32 to vector<16x128xf32>
    %8 = arith.mulf %7, %3 : vector<16x128xf32>
    %c1 = arith.constant 1 : index
    %c0_7 = arith.constant 0 : index
    %9 = memref.load %arg1[%c1, %c0_7] : memref<2x4xf32, #tpu.memory_space<smem>>
    %10 = vector.broadcast %9 : f32 to vector<16x128xf32>
    %11 = arith.mulf %10, %1 : vector<16x128xf32>
    %12 = vector.broadcast %9 : f32 to vector<16x128xf32>
    %13 = arith.mulf %12, %3 : vector<16x128xf32>
    %c1_8 = arith.constant 1 : index
    %c0_9 = arith.constant 0 : index
    %c0_10 = arith.constant 0 : index
    %14 = vector.load %arg2[%c1_8, %c0_9, %c0_10] : memref<4x16x128xf32, #tpu.memory_space<vmem>>, vector<1x16x128xf32>
    %15 = vector.shape_cast %14 : vector<1x16x128xf32> to vector<16x128xf32>
    %c1_11 = arith.constant 1 : index
    %c0_12 = arith.constant 0 : index
    %c0_13 = arith.constant 0 : index
    %16 = vector.load %arg3[%c1_11, %c0_12, %c0_13] : memref<4x16x128xf32, #tpu.memory_space<vmem>>, vector<1x16x128xf32>
    %17 = vector.shape_cast %16 : vector<1x16x128xf32> to vector<16x128xf32>
    %c0_14 = arith.constant 0 : index
    %c1_15 = arith.constant 1 : index
    %18 = memref.load %arg1[%c0_14, %c1_15] : memref<2x4xf32, #tpu.memory_space<smem>>
    %19 = vector.broadcast %18 : f32 to vector<16x128xf32>
    %20 = arith.mulf %19, %15 : vector<16x128xf32>
    %21 = arith.addf %6, %20 : vector<16x128xf32>
    %22 = vector.broadcast %18 : f32 to vector<16x128xf32>
    %23 = arith.mulf %22, %17 : vector<16x128xf32>
    %24 = arith.addf %8, %23 : vector<16x128xf32>
    %c1_16 = arith.constant 1 : index
    %c1_17 = arith.constant 1 : index
    %25 = memref.load %arg1[%c1_16, %c1_17] : memref<2x4xf32, #tpu.memory_space<smem>>
    %26 = vector.broadcast %25 : f32 to vector<16x128xf32>
    %27 = arith.mulf %26, %15 : vector<16x128xf32>
    %28 = arith.addf %11, %27 : vector<16x128xf32>
    %29 = vector.broadcast %25 : f32 to vector<16x128xf32>
    %30 = arith.mulf %29, %17 : vector<16x128xf32>
    %31 = arith.addf %13, %30 : vector<16x128xf32>
    %c2 = arith.constant 2 : index
    %c0_18 = arith.constant 0 : index
    %c0_19 = arith.constant 0 : index
    %32 = vector.load %arg2[%c2, %c0_18, %c0_19] : memref<4x16x128xf32, #tpu.memory_space<vmem>>, vector<1x16x128xf32>
    %33 = vector.shape_cast %32 : vector<1x16x128xf32> to vector<16x128xf32>
    %c2_20 = arith.constant 2 : index
    %c0_21 = arith.constant 0 : index
    %c0_22 = arith.constant 0 : index
    %34 = vector.load %arg3[%c2_20, %c0_21, %c0_22] : memref<4x16x128xf32, #tpu.memory_space<vmem>>, vector<1x16x128xf32>
    %35 = vector.shape_cast %34 : vector<1x16x128xf32> to vector<16x128xf32>
    %c0_23 = arith.constant 0 : index
    %c2_24 = arith.constant 2 : index
    %36 = memref.load %arg1[%c0_23, %c2_24] : memref<2x4xf32, #tpu.memory_space<smem>>
    %37 = vector.broadcast %36 : f32 to vector<16x128xf32>
    %38 = arith.mulf %37, %33 : vector<16x128xf32>
    %39 = arith.addf %21, %38 : vector<16x128xf32>
    %40 = vector.broadcast %36 : f32 to vector<16x128xf32>
    %41 = arith.mulf %40, %35 : vector<16x128xf32>
    %42 = arith.addf %24, %41 : vector<16x128xf32>
    %c1_25 = arith.constant 1 : index
    %c2_26 = arith.constant 2 : index
    %43 = memref.load %arg1[%c1_25, %c2_26] : memref<2x4xf32, #tpu.memory_space<smem>>
    %44 = vector.broadcast %43 : f32 to vector<16x128xf32>
    %45 = arith.mulf %44, %33 : vector<16x128xf32>
    %46 = arith.addf %28, %45 : vector<16x128xf32>
    %47 = vector.broadcast %43 : f32 to vector<16x128xf32>
    %48 = arith.mulf %47, %35 : vector<16x128xf32>
    %49 = arith.addf %31, %48 : vector<16x128xf32>
    %c3 = arith.constant 3 : index
    %c0_27 = arith.constant 0 : index
    %c0_28 = arith.constant 0 : index
    %50 = vector.load %arg2[%c3, %c0_27, %c0_28] : memref<4x16x128xf32, #tpu.memory_space<vmem>>, vector<1x16x128xf32>
    %51 = vector.shape_cast %50 : vector<1x16x128xf32> to vector<16x128xf32>
    %c3_29 = arith.constant 3 : index
    %c0_30 = arith.constant 0 : index
    %c0_31 = arith.constant 0 : index
    %52 = vector.load %arg3[%c3_29, %c0_30, %c0_31] : memref<4x16x128xf32, #tpu.memory_space<vmem>>, vector<1x16x128xf32>
    %53 = vector.shape_cast %52 : vector<1x16x128xf32> to vector<16x128xf32>
    %c0_32 = arith.constant 0 : index
    %c3_33 = arith.constant 3 : index
    %54 = memref.load %arg1[%c0_32, %c3_33] : memref<2x4xf32, #tpu.memory_space<smem>>
    %55 = vector.broadcast %54 : f32 to vector<16x128xf32>
    %56 = arith.mulf %55, %51 : vector<16x128xf32>
    %57 = arith.addf %39, %56 : vector<16x128xf32>
    %58 = vector.broadcast %54 : f32 to vector<16x128xf32>
    %59 = arith.mulf %58, %53 : vector<16x128xf32>
    %60 = arith.addf %42, %59 : vector<16x128xf32>
    %c1_34 = arith.constant 1 : index
    %c3_35 = arith.constant 3 : index
    %61 = memref.load %arg1[%c1_34, %c3_35] : memref<2x4xf32, #tpu.memory_space<smem>>
    %62 = vector.broadcast %61 : f32 to vector<16x128xf32>
    %63 = arith.mulf %62, %51 : vector<16x128xf32>
    %64 = arith.addf %46, %63 : vector<16x128xf32>
    %65 = vector.broadcast %61 : f32 to vector<16x128xf32>
    %66 = arith.mulf %65, %53 : vector<16x128xf32>
    %67 = arith.addf %49, %66 : vector<16x128xf32>
    %c0_36 = arith.constant 0 : index
    %c0_37 = arith.constant 0 : index
    %c0_38 = arith.constant 0 : index
    %c0_39 = arith.constant 0 : index
    %68 = vector.load %arg4[%c0_36, %c0_37, %c0_38, %c0_39] : memref<2x2x128x64xf32, #tpu.memory_space<vmem>>, vector<1x1x128x64xf32>
    %69 = vector.shape_cast %68 : vector<1x1x128x64xf32> to vector<128x64xf32>
    %cst = arith.constant dense<0.000000e+00> : vector<16x64xf32>
    %70 = tpu.matmul %57, %69, %cst {dimension_numbers = #tpu.dot_dimension_numbers<[1], [0], [0], [1], [0, 0, 1, 1], [], []>} : vector<16x128xf32>, vector<128x64xf32>, vector<16x64xf32> -> vector<16x64xf32>
    %c0_40 = arith.constant 0 : index
    %c1_41 = arith.constant 1 : index
    %c0_42 = arith.constant 0 : index
    %c0_43 = arith.constant 0 : index
    %71 = vector.load %arg4[%c0_40, %c1_41, %c0_42, %c0_43] : memref<2x2x128x64xf32, #tpu.memory_space<vmem>>, vector<1x1x128x64xf32>
    %72 = vector.shape_cast %71 : vector<1x1x128x64xf32> to vector<128x64xf32>
    %cst_44 = arith.constant dense<0.000000e+00> : vector<16x64xf32>
    %73 = tpu.matmul %60, %72, %cst_44 {dimension_numbers = #tpu.dot_dimension_numbers<[1], [0], [0], [1], [0, 0, 1, 1], [], []>} : vector<16x128xf32>, vector<128x64xf32>, vector<16x64xf32> -> vector<16x64xf32>
    %74 = arith.addf %70, %73 : vector<16x64xf32>
    %c0_45 = arith.constant 0 : index
    %c0_46 = arith.constant 0 : index
    %c0_47 = arith.constant 0 : index
    %75 = vector.load %arg5[%c0_45, %c0_46, %c0_47] : memref<2x1x64xf32, #tpu.memory_space<vmem>>, vector<1x1x64xf32>
    %76 = vector.shape_cast %75 : vector<1x1x64xf32> to vector<1x64xf32>
    %77 = vector.broadcast %76 : vector<1x64xf32> to vector<16x64xf32>
    %78 = arith.addf %74, %77 : vector<16x64xf32>
    %cst_48 = arith.constant 0.000000e+00 : f32
    %79 = vector.broadcast %cst_48 : f32 to vector<16x64xf32>
    %80 = arith.maximumf %78, %79 : vector<16x64xf32>
    %c0_49 = arith.constant 0 : index
    %c0_50 = arith.constant 0 : index
    %c0_51 = arith.constant 0 : index
    %81 = vector.load %arg6[%c0_49, %c0_50, %c0_51] : memref<2x64x128xf32, #tpu.memory_space<vmem>>, vector<1x64x128xf32>
    %82 = vector.shape_cast %81 : vector<1x64x128xf32> to vector<64x128xf32>
    %cst_52 = arith.constant dense<0.000000e+00> : vector<16x128xf32>
    %83 = tpu.matmul %80, %82, %cst_52 {dimension_numbers = #tpu.dot_dimension_numbers<[1], [0], [0], [1], [0, 0, 1, 1], [], []>} : vector<16x64xf32>, vector<64x128xf32>, vector<16x128xf32> -> vector<16x128xf32>
    %c0_53 = arith.constant 0 : index
    %c0_54 = arith.constant 0 : index
    %c0_55 = arith.constant 0 : index
    %84 = vector.load %arg7[%c0_53, %c0_54, %c0_55] : memref<2x1x128xf32, #tpu.memory_space<vmem>>, vector<1x1x128xf32>
    %85 = vector.shape_cast %84 : vector<1x1x128xf32> to vector<1x128xf32>
    %86 = vector.broadcast %85 : vector<1x128xf32> to vector<16x128xf32>
    %87 = arith.addf %83, %86 : vector<16x128xf32>
    %c0_56 = arith.constant 0 : index
    %c0_57 = arith.constant 0 : index
    %c0_58 = arith.constant 0 : index
    %88 = vector.load %arg8[%c0_56, %c0_57, %c0_58] : memref<2x16x128xf32, #tpu.memory_space<vmem>>, vector<1x16x128xf32>
    %89 = vector.shape_cast %88 : vector<1x16x128xf32> to vector<16x128xf32>
    %90 = vector.shape_cast %87 : vector<16x128xf32> to vector<1x16x128xf32>
    tpu.vector_store %arg8[%c0_56, %c0_57, %c0_58], %90 {strides = array<i32>} : memref<2x16x128xf32, #tpu.memory_space<vmem>>, vector<1x16x128xf32>,
    %c1_59 = arith.constant 1 : index
    %c0_60 = arith.constant 0 : index
    %c0_61 = arith.constant 0 : index
    %c0_62 = arith.constant 0 : index
    %91 = vector.load %arg4[%c1_59, %c0_60, %c0_61, %c0_62] : memref<2x2x128x64xf32, #tpu.memory_space<vmem>>, vector<1x1x128x64xf32>
    %92 = vector.shape_cast %91 : vector<1x1x128x64xf32> to vector<128x64xf32>
    %cst_63 = arith.constant dense<0.000000e+00> : vector<16x64xf32>
    %93 = tpu.matmul %64, %92, %cst_63 {dimension_numbers = #tpu.dot_dimension_numbers<[1], [0], [0], [1], [0, 0, 1, 1], [], []>} : vector<16x128xf32>, vector<128x64xf32>, vector<16x64xf32> -> vector<16x64xf32>
    %c1_64 = arith.constant 1 : index
    %c1_65 = arith.constant 1 : index
    %c0_66 = arith.constant 0 : index
    %c0_67 = arith.constant 0 : index
    %94 = vector.load %arg4[%c1_64, %c1_65, %c0_66, %c0_67] : memref<2x2x128x64xf32, #tpu.memory_space<vmem>>, vector<1x1x128x64xf32>
    %95 = vector.shape_cast %94 : vector<1x1x128x64xf32> to vector<128x64xf32>
    %cst_68 = arith.constant dense<0.000000e+00> : vector<16x64xf32>
    %96 = tpu.matmul %67, %95, %cst_68 {dimension_numbers = #tpu.dot_dimension_numbers<[1], [0], [0], [1], [0, 0, 1, 1], [], []>} : vector<16x128xf32>, vector<128x64xf32>, vector<16x64xf32> -> vector<16x64xf32>
    %97 = arith.addf %93, %96 : vector<16x64xf32>
    %c1_69 = arith.constant 1 : index
    %c0_70 = arith.constant 0 : index
    %c0_71 = arith.constant 0 : index
    %98 = vector.load %arg5[%c1_69, %c0_70, %c0_71] : memref<2x1x64xf32, #tpu.memory_space<vmem>>, vector<1x1x64xf32>
    %99 = vector.shape_cast %98 : vector<1x1x64xf32> to vector<1x64xf32>
    %100 = vector.broadcast %99 : vector<1x64xf32> to vector<16x64xf32>
    %101 = arith.addf %97, %100 : vector<16x64xf32>
    %cst_72 = arith.constant 0.000000e+00 : f32
    %102 = vector.broadcast %cst_72 : f32 to vector<16x64xf32>
    %103 = arith.maximumf %101, %102 : vector<16x64xf32>
    %c1_73 = arith.constant 1 : index
    %c0_74 = arith.constant 0 : index
    %c0_75 = arith.constant 0 : index
    %104 = vector.load %arg6[%c1_73, %c0_74, %c0_75] : memref<2x64x128xf32, #tpu.memory_space<vmem>>, vector<1x64x128xf32>
    %105 = vector.shape_cast %104 : vector<1x64x128xf32> to vector<64x128xf32>
    %cst_76 = arith.constant dense<0.000000e+00> : vector<16x128xf32>
    %106 = tpu.matmul %103, %105, %cst_76 {dimension_numbers = #tpu.dot_dimension_numbers<[1], [0], [0], [1], [0, 0, 1, 1], [], []>} : vector<16x64xf32>, vector<64x128xf32>, vector<16x128xf32> -> vector<16x128xf32>
    %c1_77 = arith.constant 1 : index
    %c0_78 = arith.constant 0 : index
    %c0_79 = arith.constant 0 : index
    %107 = vector.load %arg7[%c1_77, %c0_78, %c0_79] : memref<2x1x128xf32, #tpu.memory_space<vmem>>, vector<1x1x128xf32>
    %108 = vector.shape_cast %107 : vector<1x1x128xf32> to vector<1x128xf32>
    %109 = vector.broadcast %108 : vector<1x128xf32> to vector<16x128xf32>
    %110 = arith.addf %106, %109 : vector<16x128xf32>
    %c1_80 = arith.constant 1 : index
    %c0_81 = arith.constant 0 : index
    %c0_82 = arith.constant 0 : index
    %111 = vector.load %arg8[%c1_80, %c0_81, %c0_82] : memref<2x16x128xf32, #tpu.memory_space<vmem>>, vector<1x16x128xf32>
    %112 = vector.shape_cast %111 : vector<1x16x128xf32> to vector<16x128xf32>
    %113 = vector.shape_cast %110 : vector<16x128xf32> to vector<1x16x128xf32>
    tpu.vector_store %arg8[%c1_80, %c0_81, %c0_82], %113 {strides = array<i32>} : memref<2x16x128xf32, #tpu.memory_space<vmem>>, vector<1x16x128xf32>,
    return
  }
  func.func @transform_0(%arg0: i32, %arg1: memref<2x4xf32, #tpu.memory_space<smem>>) -> (i32, i32, i32) {
    %c0_i32 = arith.constant 0 : i32
    %c0_i32_0 = arith.constant 0 : i32
    %c0_i32_1 = arith.constant 0 : i32
    return %c0_i32, %arg0, %c0_i32_0 : i32, i32, i32
  }
  func.func @transform_1(%arg0: i32, %arg1: memref<2x4xf32, #tpu.memory_space<smem>>) -> (i32, i32, i32) {
    %c0_i32 = arith.constant 0 : i32
    %c0_i32_0 = arith.constant 0 : i32
    %c0_i32_1 = arith.constant 0 : i32
    return %c0_i32, %arg0, %c0_i32_0 : i32, i32, i32
  }
  func.func @transform_2(%arg0: i32, %arg1: memref<2x4xf32, #tpu.memory_space<smem>>) -> (i32, i32, i32, i32) {
    %c0_i32 = arith.constant 0 : i32
    %c0_i32_0 = arith.constant 0 : i32
    %c0_i32_1 = arith.constant 0 : i32
    %c0_i32_2 = arith.constant 0 : i32
    %c0_i32_3 = arith.constant 0 : i32
    return %c0_i32, %c0_i32_0, %c0_i32_1, %c0_i32_2 : i32, i32, i32, i32
  }
  func.func @transform_3(%arg0: i32, %arg1: memref<2x4xf32, #tpu.memory_space<smem>>) -> (i32, i32, i32) {
    %c0_i32 = arith.constant 0 : i32
    %c0_i32_0 = arith.constant 0 : i32
    %c0_i32_1 = arith.constant 0 : i32
    %c0_i32_2 = arith.constant 0 : i32
    return %c0_i32, %c0_i32_0, %c0_i32_1 : i32, i32, i32
  }
  func.func @transform_4(%arg0: i32, %arg1: memref<2x4xf32, #tpu.memory_space<smem>>) -> (i32, i32, i32) {
    %c0_i32 = arith.constant 0 : i32
    %c0_i32_0 = arith.constant 0 : i32
    %c0_i32_1 = arith.constant 0 : i32
    %c0_i32_2 = arith.constant 0 : i32
    return %c0_i32, %c0_i32_0, %c0_i32_1 : i32, i32, i32
  }
  func.func @transform_5(%arg0: i32, %arg1: memref<2x4xf32, #tpu.memory_space<smem>>) -> (i32, i32, i32) {
    %c0_i32 = arith.constant 0 : i32
    %c0_i32_0 = arith.constant 0 : i32
    %c0_i32_1 = arith.constant 0 : i32
    %c0_i32_2 = arith.constant 0 : i32
    return %c0_i32, %c0_i32_0, %c0_i32_1 : i32, i32, i32
  }
  func.func @transform_6(%arg0: i32, %arg1: memref<2x4xf32, #tpu.memory_space<smem>>) -> (i32, i32, i32) {
    %c0_i32 = arith.constant 0 : i32
    %c0_i32_0 = arith.constant 0 : i32
    %c0_i32_1 = arith.constant 0 : i32
    return %c0_i32, %arg0, %c0_i32_0 : i32, i32, i32
  }
}

</mosaic_0001>

<llo_original>
// kernel: tpu_custom_call.1
$region0: #{tpu_custom_call.1}
  #allocation0 [shape = 'u32[]', space=smem, size = 0x4, offset = 0x4, fixed_abs, tag = 'smem constant byte address 0x4 - core index']
  #allocation1 [shape = 'u32[72,128]{1,0:T(1,128)}', space=vmem, size = 0x9000, scoped, tag = 'internal scratch']
  #allocation2 [shape = 's32[1]{0}', space=sflag, size = 0x4, scoped, tag = 'scoped memory for tpu_custom_call.1']
  #allocation3 [shape = 'u8[1024]{0}', space=smem, size = 0x400, scoped, tag = 'prefetched SMEM operand 0']
  %s0 = inlined_call_operand.vmem [shape: f32[2,4], index: 0, kind: input, shape index: {}]
  %s1 = inlined_call_operand.vmem [shape: f32[4,16,128], index: 1, kind: input, shape index: {}]
  %s2 = inlined_call_operand.vmem [shape: f32[4,16,128], index: 2, kind: input, shape index: {}]
  %s3 = inlined_call_operand.vmem [shape: f32[2,2,128,64], index: 3, kind: input, shape index: {}]
  %s4 = inlined_call_operand.vmem [shape: f32[2,1,64], index: 4, kind: input, shape index: {}]
  %s5 = inlined_call_operand.vmem [shape: f32[2,64,128], index: 5, kind: input, shape index: {}]
  %s6 = inlined_call_operand.vmem [shape: f32[2,1,128], index: 6, kind: input, shape index: {}]
  %s7 = inlined_call_operand.hbm [shape: f32[2,16,128], index: 7, kind: output, shape index: {}]
  %s8 = sld [smem:[#allocation0]]
  $region34: #{tpu_custom_call.1} parent=0
    _
  %s10 = ssub.s32 1, %s8
  %s11 = scalar_select 0, %s10, %s8
  %s13 = sshll.u32 %s0, 4
  %s14 = int_to_ptr.vmem [resolvable:$true] %s13
  %16 = dma.vmem_to_smem %s14, 32, [#allocation3], [#allocation2]
  %18 = dma.done [#allocation2], 32
  %19 = sfence
  $region1: #{tpu_custom_call.1} parent=0
    #allocation4 [shape = 'u8[16384]{0}', space=vmem, size = 0x4000, scoped, tag = 'output window, operand 0, single buffered']
    #allocation5 [shape = 's32[1]{0}', space=sflag, size = 0x4, scoped, tag = 'scoped memory for tpu_custom_call.1']
    %20 = vsyncpa [#allocation5], 0
    // Predicated region
    $region2: #{tpu_custom_call.1} parent=1 // pred_check
      _
    $region3: #{tpu_custom_call.1} parent=1 // pred_check_branch
      %22 = sbr.rel (0) target = $region5
    $region4: #{tpu_custom_call.1} parent=1 // pred_region
      _
    $region5: #{tpu_custom_call.1} parent=1 // pred_fallthru
      _
    // Predicated region
    $region6: #{tpu_custom_call.1} parent=1 // pred_check
      _
    $region7: #{tpu_custom_call.1} parent=1 // pred_check_branch
      %24 = sbr.rel (0) target = $region9
    $region8: #{tpu_custom_call.1} parent=1 // pred_region
      _
    $region9: #{tpu_custom_call.1} parent=1 // pred_fallthru
      _
    // Predicated region
    $region10: #{tpu_custom_call.1} parent=1 // pred_check
      _
    $region11: #{tpu_custom_call.1} parent=1 // pred_check_branch
      %26 = sbr.rel (0) target = $region13
    $region12: #{tpu_custom_call.1} parent=1 // pred_region
      _
    $region13: #{tpu_custom_call.1} parent=1 // pred_fallthru
      _
    // Predicated region
    $region14: #{tpu_custom_call.1} parent=1 // pred_check
      _
    $region15: #{tpu_custom_call.1} parent=1 // pred_check_branch
      %28 = sbr.rel (0) target = $region17
    $region16: #{tpu_custom_call.1} parent=1 // pred_region
      _
    $region17: #{tpu_custom_call.1} parent=1 // pred_fallthru
      _
    // Predicated region
    $region18: #{tpu_custom_call.1} parent=1 // pred_check
      _
    $region19: #{tpu_custom_call.1} parent=1 // pred_check_branch
      %30 = sbr.rel (0) target = $region21
    $region20: #{tpu_custom_call.1} parent=1 // pred_region
      _
    $region21: #{tpu_custom_call.1} parent=1 // pred_fallthru
      _
    // Predicated region
    $region22: #{tpu_custom_call.1} parent=1 // pred_check
      _
    $region23: #{tpu_custom_call.1} parent=1 // pred_check_branch
      %32 = sbr.rel (0) target = $region25
    $region24: #{tpu_custom_call.1} parent=1 // pred_region
      _
    $region25: #{tpu_custom_call.1} parent=1 // pred_fallthru
      _
    %v33 = vld [vmem:[%s1] sm:$0xff]
    %v34 = vld [vmem:[%s1 + $0x8] sm:$0xff]
    %v35 = vld [vmem:[%s2] sm:$0xff]
    %v36 = vld [vmem:[%s2 + $0x8] sm:$0xff]
    %s37 = sld [smem:[#allocation3]]
    %v38 = vstv %s37
    %v39 = vmul.f32 %v38, %v33
    %v40 = vmul.f32 %v38, %v34
    %v41 = vmul.f32 %v38, %v35
    %v42 = vmul.f32 %v38, %v36
    %s43 = sld [smem:[#allocation3 + $0x80]]
    %v44 = vstv %s43
    %v45 = vmul.f32 %v44, %v33
    %v46 = vmul.f32 %v44, %v34
    %v47 = vmul.f32 %v44, %v35
    %v48 = vmul.f32 %v44, %v36
    %s49 = scalar_lea.vmem %s1, 16
    %v50 = vld [vmem:[%s49] sm:$0xff]
    %v51 = vld [vmem:[%s49 + $0x8] sm:$0xff]
    %s52 = scalar_lea.vmem %s2, 16
    %v53 = vld [vmem:[%s52] sm:$0xff]
    %v54 = vld [vmem:[%s52 + $0x8] sm:$0xff]
    %s55 = sld [smem:[#allocation3 + $0x1]]
    %v56 = vstv %s55
    %v57 = vmul.f32 %v56, %v50
    %v58 = vmul.f32 %v56, %v51
    %v59 = vadd.f32 %v39, %v57
    %v60 = vadd.f32 %v40, %v58
    %v61 = vmul.f32 %v56, %v53
    %v62 = vmul.f32 %v56, %v54
    %v63 = vadd.f32 %v41, %v61
    %v64 = vadd.f32 %v42, %v62
    %s65 = sld [smem:[#allocation3 + $0x81]]
    %v66 = vstv %s65
    %v67 = vmul.f32 %v66, %v50
    %v68 = vmul.f32 %v66, %v51
    %v69 = vadd.f32 %v45, %v67
    %v70 = vadd.f32 %v46, %v68
    %v71 = vmul.f32 %v66, %v53
    %v72 = vmul.f32 %v66, %v54
    %v73 = vadd.f32 %v47, %v71
    %v74 = vadd.f32 %v48, %v72
    %s75 = scalar_lea.vmem %s1, 32
    %v76 = vld [vmem:[%s75] sm:$0xff]
    %v77 = vld [vmem:[%s75 + $0x8] sm:$0xff]
    %s78 = scalar_lea.vmem %s2, 32
    %v79 = vld [vmem:[%s78] sm:$0xff]
    %v80 = vld [vmem:[%s78 + $0x8] sm:$0xff]
    %s81 = sld [smem:[#allocation3 + $0x2]]
    %v82 = vstv %s81
    %v83 = vmul.f32 %v82, %v76
    %v84 = vmul.f32 %v82, %v77
    %v85 = vadd.f32 %v59, %v83
    %v86 = vadd.f32 %v60, %v84
    %v87 = vmul.f32 %v82, %v79
    %v88 = vmul.f32 %v82, %v80
    %v89 = vadd.f32 %v63, %v87
    %v90 = vadd.f32 %v64, %v88
    %s91 = sld [smem:[#allocation3 + $0x82]]
    %v92 = vstv %s91
    %v93 = vmul.f32 %v92, %v76
    %v94 = vmul.f32 %v92, %v77
    %v95 = vadd.f32 %v69, %v93
    %v96 = vadd.f32 %v70, %v94
    %v97 = vmul.f32 %v92, %v79
    %v98 = vmul.f32 %v92, %v80
    %v99 = vadd.f32 %v73, %v97
    %v100 = vadd.f32 %v74, %v98
    %s101 = scalar_lea.vmem %s1, 48
    %v102 = vld [vmem:[%s101] sm:$0xff]
    %v103 = vld [vmem:[%s101 + $0x8] sm:$0xff]
    %s104 = scalar_lea.vmem %s2, 48
    %v105 = vld [vmem:[%s104] sm:$0xff]
    %v106 = vld [vmem:[%s104 + $0x8] sm:$0xff]
    %s107 = sld [smem:[#allocation3 + $0x3]]
    %v108 = vstv %s107
    %v109 = vmul.f32 %v108, %v102
    %v110 = vmul.f32 %v108, %v103
    %v111 = vadd.f32 %v85, %v109
    %v112 = vadd.f32 %v86, %v110
    %v113 = vmul.f32 %v108, %v105
    %v114 = vmul.f32 %v108, %v106
    %v115 = vadd.f32 %v89, %v113
    %v116 = vadd.f32 %v90, %v114
    %s117 = sld [smem:[#allocation3 + $0x83]]
    %v118 = vstv %s117
    %v119 = vmul.f32 %v118, %v102
    %v120 = vmul.f32 %v118, %v103
    %v121 = vadd.f32 %v95, %v119
    %v122 = vadd.f32 %v96, %v120
    %v123 = vmul.f32 %v118, %v105
    %v124 = vmul.f32 %v118, %v106
    %v125 = vadd.f32 %v99, %v123
    %v126 = vadd.f32 %v100, %v124
    %v127 = vld [vmem:[%s3] sm:$0xff]
    %v128 = vld [vmem:[%s3 + $0x8] sm:$0xff]
    %v129 = vld [vmem:[%s3 + $0x10] sm:$0xff]
    %v130 = vld [vmem:[%s3 + $0x18] sm:$0xff]
    %v131 = vld [vmem:[%s3 + $0x20] sm:$0xff]
    %v132 = vld [vmem:[%s3 + $0x28] sm:$0xff]
    %v133 = vld [vmem:[%s3 + $0x30] sm:$0xff]
    %v134 = vld [vmem:[%s3 + $0x38] sm:$0xff]
    %v135 = vld [vmem:[%s3 + $0x40] sm:$0xff]
    %v136 = vld [vmem:[%s3 + $0x48] sm:$0xff]
    %v137 = vld [vmem:[%s3 + $0x50] sm:$0xff]
    %v138 = vld [vmem:[%s3 + $0x58] sm:$0xff]
    %v139 = vld [vmem:[%s3 + $0x60] sm:$0xff]
    %v140 = vld [vmem:[%s3 + $0x68] sm:$0xff]
    %v141 = vld [vmem:[%s3 + $0x70] sm:$0xff]
    %v142 = vld [vmem:[%s3 + $0x78] sm:$0xff]
    %s143 = scalar_lea.vmem %s3, 128
    %v144 = vld [vmem:[%s143] sm:$0xff]
    %v145 = vld [vmem:[%s143 + $0x8] sm:$0xff]
    %v146 = vld [vmem:[%s143 + $0x10] sm:$0xff]
    %v147 = vld [vmem:[%s143 + $0x18] sm:$0xff]
    %v148 = vld [vmem:[%s143 + $0x20] sm:$0xff]
    %v149 = vld [vmem:[%s143 + $0x28] sm:$0xff]
    %v150 = vld [vmem:[%s143 + $0x30] sm:$0xff]
    %v151 = vld [vmem:[%s143 + $0x38] sm:$0xff]
    %v152 = vld [vmem:[%s143 + $0x40] sm:$0xff]
    %v153 = vld [vmem:[%s143 + $0x48] sm:$0xff]
    %v154 = vld [vmem:[%s143 + $0x50] sm:$0xff]
    %v155 = vld [vmem:[%s143 + $0x58] sm:$0xff]
    %v156 = vld [vmem:[%s143 + $0x60] sm:$0xff]
    %v157 = vld [vmem:[%s143 + $0x68] sm:$0xff]
    %v158 = vld [vmem:[%s143 + $0x70] sm:$0xff]
    %v159 = vld [vmem:[%s143 + $0x78] sm:$0xff]
    %160 = vmatpush.msra.mxu0 %v159
    %161 = vmatpush.msra.mxu0 %v158
    %162 = vmatpush.msra.mxu0 %v157
    %163 = vmatpush.msra.mxu0 %v156
    %164 = vmatpush.msra.mxu0 %v155
    %165 = vmatpush.msra.mxu0 %v154
    %166 = vmatpush.msra.mxu0 %v153
    %167 = vmatpush.msra.mxu0 %v152
    %168 = vmatpush.msra.mxu0 %v151
    %169 = vmatpush.msra.mxu0 %v150
    %170 = vmatpush.msra.mxu0 %v149
    %171 = vmatpush.msra.mxu0 %v148
    %172 = vmatpush.msra.mxu0 %v147
    %173 = vmatpush.msra.mxu0 %v146
    %174 = vmatpush.msra.mxu0 %v145
    %175 = vmatpush.msra.mxu0 %v144
    %176 = vmatmul.f32.gmra.mxu0 %v115
    %v177 = vpop.f32.mrf.mxu0
    %v178 = vadd.f32 0.0, %v177
    %179 = vmatmul.f32.gmra.mxu0 %v116
    %v180 = vpop.f32.mrf.mxu0
    %v181 = vadd.f32 0.0, %v180
    %182 = vdwg.mxu0
    %183 = vmatpush.msra.mxu0 %v142
    %184 = vmatpush.msra.mxu0 %v141
    %185 = vmatpush.msra.mxu0 %v140
    %186 = vmatpush.msra.mxu0 %v139
    %187 = vmatpush.msra.mxu0 %v138
    %188 = vmatpush.msra.mxu0 %v137
    %189 = vmatpush.msra.mxu0 %v136
    %190 = vmatpush.msra.mxu0 %v135
    %191 = vmatpush.msra.mxu0 %v134
    %192 = vmatpush.msra.mxu0 %v133
    %193 = vmatpush.msra.mxu0 %v132
    %194 = vmatpush.msra.mxu0 %v131
    %195 = vmatpush.msra.mxu0 %v130
    %196 = vmatpush.msra.mxu0 %v129
    %197 = vmatpush.msra.mxu0 %v128
    %198 = vmatpush.msra.mxu0 %v127
    %199 = vmatmul.f32.gmra.mxu0 %v111
    %v200 = vpop.f32.mrf.mxu0
    %v201 = vadd.f32 %v178, %v200
    %202 = vmatmul.f32.gmra.mxu0 %v112
    %v203 = vpop.f32.mrf.mxu0
    %v204 = vadd.f32 %v181, %v203
    %205 = vdwg.mxu0
    %v206 = vld [vmem:[%s4] sm:$0x1]
    %v208 = vperm.slane %v206, 0
    %v210 = vadd.f32 %v201, %v208
    %v211 = vadd.f32 %v204, %v208
    %v212 = vmax.f32 %v210, 0.0
    %v213 = vmax.f32 %v211, 0.0
    %v214 = vld [vmem:[%s5] sm:$0xff]
    %v215 = vld [vmem:[%s5 + $0x8] sm:$0xff]
    %v216 = vld [vmem:[%s5 + $0x10] sm:$0xff]
    %v217 = vld [vmem:[%s5 + $0x18] sm:$0xff]
    %v218 = vld [vmem:[%s5 + $0x20] sm:$0xff]
    %v219 = vld [vmem:[%s5 + $0x28] sm:$0xff]
    %v220 = vld [vmem:[%s5 + $0x30] sm:$0xff]
    %v221 = vld [vmem:[%s5 + $0x38] sm:$0xff]
    %v222 = vld [vmem:[%s6] sm:$0x1]
    %v224 = vperm.slane %v222, 0
    %vm226 = vcmask 523264
    %v228 = vsel %vm226, %v212, 0
    %v231 = vsel %vm226, %v213, 0
    %233 = vmatpush.msra.mxu0 0.0
    %234 = vmatpush.msra.mxu0 0.0
    %235 = vmatpush.msra.mxu0 0.0
    %236 = vmatpush.msra.mxu0 0.0
    %237 = vmatpush.msra.mxu0 0.0
    %238 = vmatpush.msra.mxu0 0.0
    %239 = vmatpush.msra.mxu0 0.0
    %240 = vmatpush.msra.mxu0 0.0
    %241 = vmatpush.msra.mxu0 %v221
    %242 = vmatpush.msra.mxu0 %v220
    %243 = vmatpush.msra.mxu0 %v219
    %244 = vmatpush.msra.mxu0 %v218
    %245 = vmatpush.msra.mxu0 %v217
    %246 = vmatpush.msra.mxu0 %v216
    %247 = vmatpush.msra.mxu0 %v215
    %248 = vmatpush.msra.mxu0 %v214
    %249 = vmatmul.f32.gmra.mxu0 %v228
    %v250 = vpop.f32.mrf.mxu0
    %v251 = vadd.f32 %v224, %v250
    %252 = vmatmul.f32.gmra.mxu0 %v231
    %v253 = vpop.f32.mrf.mxu0
    %v254 = vadd.f32 %v224, %v253
    %255 = vdwg.mxu0
    %256 = vst [vmem:[#allocation4] sm:$0xff] %v251
    %257 = vst [vmem:[#allocation4 + $0x8] sm:$0xff] %v254
    %s258 = scalar_lea.vmem %s3, 256
    %v259 = vld [vmem:[%s258] sm:$0xff]
    %v260 = vld [vmem:[%s258 + $0x8] sm:$0xff]
    %v261 = vld [vmem:[%s258 + $0x10] sm:$0xff]
    %v262 = vld [vmem:[%s258 + $0x18] sm:$0xff]
    %v263 = vld [vmem:[%s258 + $0x20] sm:$0xff]
    %v264 = vld [vmem:[%s258 + $0x28] sm:$0xff]
    %v265 = vld [vmem:[%s258 + $0x30] sm:$0xff]
    %v266 = vld [vmem:[%s258 + $0x38] sm:$0xff]
    %v267 = vld [vmem:[%s258 + $0x40] sm:$0xff]
    %v268 = vld [vmem:[%s258 + $0x48] sm:$0xff]
    %v269 = vld [vmem:[%s258 + $0x50] sm:$0xff]
    %v270 = vld [vmem:[%s258 + $0x58] sm:$0xff]
    %v271 = vld [vmem:[%s258 + $0x60] sm:$0xff]
    %v272 = vld [vmem:[%s258 + $0x68] sm:$0xff]
    %v273 = vld [vmem:[%s258 + $0x70] sm:$0xff]
    %v274 = vld [vmem:[%s258 + $0x78] sm:$0xff]
    %s275 = scalar_lea.vmem %s3, 384
    %v276 = vld [vmem:[%s275] sm:$0xff]
    %v277 = vld [vmem:[%s275 + $0x8] sm:$0xff]
    %v278 = vld [vmem:[%s275 + $0x10] sm:$0xff]
    %v279 = vld [vmem:[%s275 + $0x18] sm:$0xff]
    %v280 = vld [vmem:[%s275 + $0x20] sm:$0xff]
    %v281 = vld [vmem:[%s275 + $0x28] sm:$0xff]
    %v282 = vld [vmem:[%s275 + $0x30] sm:$0xff]
    %v283 = vld [vmem:[%s275 + $0x38] sm:$0xff]
    %v284 = vld [vmem:[%s275 + $0x40] sm:$0xff]
    %v285 = vld [vmem:[%s275 + $0x48] sm:$0xff]
    %v286 = vld [vmem:[%s275 + $0x50] sm:$0xff]
    %v287 = vld [vmem:[%s275 + $0x58] sm:$0xff]
    %v288 = vld [vmem:[%s275 + $0x60] sm:$0xff]
    %v289 = vld [vmem:[%s275 + $0x68] sm:$0xff]
    %v290 = vld [vmem:[%s275 + $0x70] sm:$0xff]
    %v291 = vld [vmem:[%s275 + $0x78] sm:$0xff]
    %292 = vmatpush.msra.mxu0 %v291
    %293 = vmatpush.msra.mxu0 %v290
    %294 = vmatpush.msra.mxu0 %v289
    %295 = vmatpush.msra.mxu0 %v288
    %296 = vmatpush.msra.mxu0 %v287
    %297 = vmatpush.msra.mxu0 %v286
    %298 = vmatpush.msra.mxu0 %v285
    %299 = vmatpush.msra.mxu0 %v284
    %300 = vmatpush.msra.mxu0 %v283
    %301 = vmatpush.msra.mxu0 %v282
    %302 = vmatpush.msra.mxu0 %v281
    %303 = vmatpush.msra.mxu0 %v280
    %304 = vmatpush.msra.mxu0 %v279
    %305 = vmatpush.msra.mxu0 %v278
    %306 = vmatpush.msra.mxu0 %v277
    %307 = vmatpush.msra.mxu0 %v276
    %308 = vmatmul.f32.gmra.mxu0 %v125
    %v309 = vpop.f32.mrf.mxu0
    %v310 = vadd.f32 0.0, %v309
    %311 = vmatmul.f32.gmra.mxu0 %v126
    %v312 = vpop.f32.mrf.mxu0
    %v313 = vadd.f32 0.0, %v312
    %314 = vdwg.mxu0
    %315 = vmatpush.msra.mxu0 %v274
    %316 = vmatpush.msra.mxu0 %v273
    %317 = vmatpush.msra.mxu0 %v272
    %318 = vmatpush.msra.mxu0 %v271
    %319 = vmatpush.msra.mxu0 %v270
    %320 = vmatpush.msra.mxu0 %v269
    %321 = vmatpush.msra.mxu0 %v268
    %322 = vmatpush.msra.mxu0 %v267
    %323 = vmatpush.msra.mxu0 %v266
    %324 = vmatpush.msra.mxu0 %v265
    %325 = vmatpush.msra.mxu0 %v264
    %326 = vmatpush.msra.mxu0 %v263
    %327 = vmatpush.msra.mxu0 %v262
    %328 = vmatpush.msra.mxu0 %v261
    %329 = vmatpush.msra.mxu0 %v260
    %330 = vmatpush.msra.mxu0 %v259
    %331 = vmatmul.f32.gmra.mxu0 %v121
    %v332 = vpop.f32.mrf.mxu0
    %v333 = vadd.f32 %v310, %v332
    %334 = vmatmul.f32.gmra.mxu0 %v122
    %v335 = vpop.f32.mrf.mxu0
    %v336 = vadd.f32 %v313, %v335
    %337 = vdwg.mxu0
    %s338 = scalar_lea.vmem %s4, 1
    %v339 = vld [vmem:[%s338] sm:$0x1]
    %v341 = vperm.slane %v339, 0
    %v343 = vadd.f32 %v333, %v341
    %v344 = vadd.f32 %v336, %v341
    %v345 = vmax.f32 %v343, 0.0
    %v346 = vmax.f32 %v344, 0.0
    %s347 = scalar_lea.vmem %s5, 64
    %v348 = vld [vmem:[%s347] sm:$0xff]
    %v349 = vld [vmem:[%s347 + $0x8] sm:$0xff]
    %v350 = vld [vmem:[%s347 + $0x10] sm:$0xff]
    %v351 = vld [vmem:[%s347 + $0x18] sm:$0xff]
    %v352 = vld [vmem:[%s347 + $0x20] sm:$0xff]
    %v353 = vld [vmem:[%s347 + $0x28] sm:$0xff]
    %v354 = vld [vmem:[%s347 + $0x30] sm:$0xff]
    %v355 = vld [vmem:[%s347 + $0x38] sm:$0xff]
    %s356 = scalar_lea.vmem %s6, 1
    %v357 = vld [vmem:[%s356] sm:$0x1]
    %v359 = vperm.slane %v357, 0
    %v362 = vsel %vm226, %v345, 0
    %v365 = vsel %vm226, %v346, 0
    %367 = vmatpush.msra.mxu0 0.0
    %368 = vmatpush.msra.mxu0 0.0
    %369 = vmatpush.msra.mxu0 0.0
    %370 = vmatpush.msra.mxu0 0.0
    %371 = vmatpush.msra.mxu0 0.0
    %372 = vmatpush.msra.mxu0 0.0
    %373 = vmatpush.msra.mxu0 0.0
    %374 = vmatpush.msra.mxu0 0.0
    %375 = vmatpush.msra.mxu0 %v355
    %376 = vmatpush.msra.mxu0 %v354
    %377 = vmatpush.msra.mxu0 %v353
    %378 = vmatpush.msra.mxu0 %v352
    %379 = vmatpush.msra.mxu0 %v351
    %380 = vmatpush.msra.mxu0 %v350
    %381 = vmatpush.msra.mxu0 %v349
    %382 = vmatpush.msra.mxu0 %v348
    %383 = vmatmul.f32.gmra.mxu0 %v362
    %v384 = vpop.f32.mrf.mxu0
    %v385 = vadd.f32 %v359, %v384
    %386 = vmatmul.f32.gmra.mxu0 %v365
    %v387 = vpop.f32.mrf.mxu0
    %v388 = vadd.f32 %v359, %v387
    %389 = vdwg.mxu0
    %s390 = scalar_lea.vmem [#allocation4], 16
    %391 = vst [vmem:[%s390] sm:$0xff] %v385
    %392 = vst [vmem:[%s390 + $0x8] sm:$0xff] %v388
    // Predicated region
    $region26: #{tpu_custom_call.1} parent=1 // pred_check
      _
    $region27: #{tpu_custom_call.1} parent=1 // pred_check_branch
      %394 = sbr.rel (0) target = $region29
    $region28: #{tpu_custom_call.1} parent=1 // pred_region
      %396 = vsyncadd [#allocation5], 0
      %s397 = sshll.u32 [#allocation4], 4
      %s398 = int_to_ptr.vmem [resolvable:$true] %s397
      %s399 = sshll.u32 %s7, 4
      %s400 = int_to_ptr.hbm [resolvable:$true] %s399
      %405 = dma.vmem_to_hbm [thread:$0]  %s398, 512, %s400, [#allocation5], 128, 128, 8
    $region29: #{tpu_custom_call.1} parent=1 // pred_fallthru
      _
    // Predicated region
    $region30: #{tpu_custom_call.1} parent=1 // pred_check
      _
    $region31: #{tpu_custom_call.1} parent=1 // pred_check_branch
      %407 = sbr.rel (0) target = $region33
    $region32: #{tpu_custom_call.1} parent=1 // pred_region
      %409 = dma.done [#allocation5], 512
    $region33: #{tpu_custom_call.1} parent=1 // pred_fallthru
      _
    %410 = vsyncpa [#allocation5], 1

</llo_original>
